<compile_context>
chip_gen: v7x
topology: tpu7x:2x2x1
jax: 0.10.0
libtpu: 0.0.40
codegen_flags: <defaults>
</compile_context>

<pallas_src>
import functools

import numpy as np
import jax
import jax.numpy as jnp
from jax import lax
from jax.experimental import pallas as pl
from jax.experimental.pallas import tpu as pltpu


# ------------------- Pallas kernel: fused reprojection + L1 partial sums -------------------

def _reproject_l1_kernel(p_ref, slab_ref, out_ref, *, n_points, tile_n, out_w, need_mask):
    # p_ref:    (B, 16)        f32 VMEM — per-batch P = RT @ M, row-major (resident: same
    #                                      block index every grid step -> fetched once)
    # slab_ref: (5, B, tile_n) f32 VMEM — rows 0..2 = x,y,z ; rows 3,4 = target u,v
    # out_ref:  (1, B, out_w)  f32 VMEM — per-chunk, per-batch, per-lane partial sums
    x = slab_ref[0]            # (B, tile_n)  — batch on sublanes, points on lanes
    y = slab_ref[1]
    z = slab_ref[2]
    tu = slab_ref[3]
    tv = slab_ref[4]
    p = p_ref[...]             # (B, 16)

    def col(c):
        # [x y z 1] @ P column c — homogeneous 1 folded into the bias row P[3, :].
        return (x * p[:, c:c + 1] + y * p[:, 4 + c:5 + c]
                + z * p[:, 8 + c:9 + c] + p[:, 12 + c:13 + c])

    u = col(0)
    v = col(1)
    w = col(3)                               # column 2 of P is never needed
    inv_w = pl.reciprocal(w, approx=True)    # EUP slot (free vs. VALU)
    inv_w = inv_w * (2.0 - w * inv_w)        # one Newton step -> ~f32 accuracy
    dudv = jnp.abs(u * inv_w - tu) + jnp.abs(v * inv_w - tv)   # (B, tile_n)

    if need_mask:
        # Last chunk overhangs N: zero the out-of-range lanes before accumulating.
        lane = lax.broadcasted_iota(jnp.int32, dudv.shape, 1) + pl.program_id(0) * tile_n
        dudv = jnp.where(lane < n_points, dudv, 0.0)

    # Lane-group accumulation on the VPU (static 128-lane slices are vreg selects);
    # the single cross-lane reduce happens on the tiny partials array in the wrapper.
    if tile_n > out_w:
        acc = dudv[:, 0:out_w]
        for j in range(1, tile_n // out_w):
            acc = acc + dudv[:, j * out_w:(j + 1) * out_w]
    else:
        acc = dudv
    out_ref[0] = acc


def _choose_tile_n(batch, n, vmem_budget_bytes=4 << 20, max_tile=8192):
    """Pick a lane-tile: <=128 only when N itself is, otherwise a multiple of 128 sized
    so the double-buffered input tile (2 * 5 * B * T * 4 bytes) stays well under the
    scoped-VMEM defaults of every generation (v5e 16 MiB, v6e/v7x 32 MiB)."""
    if n <= 128:
        return n
    t = vmem_budget_bytes // (2 * 5 * max(batch, 1) * 4)
    t = max(128, min(max_tile, (t // 128) * 128))
    if n % 128 == 0:
        return min(n, t)
    n_up = ((n + 127) // 128) * 128
    return min(n_up, t)


def reproject_l1_loss(P, verts3d, points2d_inv):
    """loss = mean |(verts_homo @ P)[:, :, :2] / w - points2d_inv|, fused on-chip."""
    B, N, _ = verts3d.shape
    p_tab = P.reshape(B, 16).astype(jnp.float32)

    # Single producer op: cast + concat + relayout to coordinate-major (5, B, N).
    # (One HBM materialization instead of two separate transposed arrays.)
    # TODO(synk): if upstream can emit coordinate-major f32 data directly, even this
    # one relayout disappears.
    slab = jnp.concatenate([verts3d.astype(jnp.float32),
                            points2d_inv.astype(jnp.float32)], axis=-1)   # (B, N, 5)
    slab = jnp.transpose(slab, (2, 0, 1))                                  # (5, B, N)

    tile_n = _choose_tile_n(B, N)
    num_chunks = -(-N // tile_n)
    out_w = 128 if tile_n >= 128 else tile_n
    need_mask = (num_chunks * tile_n) != N

    kern = functools.partial(_reproject_l1_kernel, n_points=N, tile_n=tile_n,
                             out_w=out_w, need_mask=need_mask)

    partials = pl.pallas_call(
        kern,
        out_shape=jax.ShapeDtypeStruct((num_chunks, B, out_w), jnp.float32),
        grid_spec=pltpu.PrefetchScalarGridSpec(
            num_scalar_prefetch=0,
            grid=(num_chunks,),
            in_specs=[
                pl.BlockSpec((B, 16), lambda i: (0, 0)),             # P table (resident)
                pl.BlockSpec((5, B, tile_n), lambda i: (0, 0, i)),   # packed slab chunk
            ],
            out_specs=pl.BlockSpec((1, B, out_w), lambda i: (i, 0, 0)),
        ),
        compiler_params=pltpu.CompilerParams(
            dimension_semantics=("parallel",),      # chunks are independent -> 2 TCs on v7x
            vmem_limit_bytes=32 * 1024 * 1024,
        ),
    )(p_tab, slab)

    # Tiny epilogue reduction (num_chunks x B x <=128 elements) + L1 mean scaling.
    return jnp.sum(partials) * (1.0 / float(B * N * 2))


# ------------------------- PnP-DLT (plain-JAX glue) ---------------------------

def solve_pnp_dlt(world_points, img_points, intrinsics, svd_eps=1e-5):
    """Faithful JAX re-implementation of kornia.geometry.solve_pnp_dlt (no weights).

    # TODO(synk): batched SVD / QR / inverse have no Pallas TPU equivalent; they stay
    # in jnp.linalg.  The data-dependent planarity assert (svd_eps) is omitted, and
    # the float64 path of the PyTorch module runs in float32 (TPU has no f64).
    """
    B, N = world_points.shape[:2]
    dtype = world_points.dtype
    ones = jnp.ones((B, N, 1), dtype)

    intrinsics_inv = jnp.linalg.inv(intrinsics)
    img_h = jnp.concatenate([img_points, ones], axis=-1)                   # (B,N,3)
    norm_pts = jnp.einsum('bij,bnj->bni', intrinsics_inv, img_h)
    norm_img = norm_pts[..., :2] / norm_pts[..., 2:3]                      # (B,N,2)

    world_h = jnp.concatenate([world_points, ones], axis=-1)               # (B,N,4)
    zeros4 = jnp.zeros_like(world_h)
    row_u = jnp.concatenate([world_h, zeros4, -world_h * norm_img[..., 0:1]], axis=-1)
    row_v = jnp.concatenate([zeros4, world_h, -world_h * norm_img[..., 1:2]], axis=-1)
    system = jnp.stack([row_u, row_v], axis=2).reshape(B, 2 * N, 12)

    _, _, vh = jnp.linalg.svd(system, full_matrices=True)
    solution = vh[:, -1, :].reshape(B, 3, 4)

    det = jnp.linalg.det(solution[:, :, :3])
    sign_fix = jnp.where(det < 0, -1.0, 1.0).astype(dtype)
    solution = solution * sign_fix[:, None, None]

    norm_col = jnp.linalg.norm(solution[:, :, 0], axis=1)
    temp = solution / norm_col[:, None, None]

    q, r = jnp.linalg.qr(temp[:, :, :3])
    diag_r = jnp.diagonal(r, axis1=1, axis2=2)                             # (B,3)
    col_sign = jnp.sign(jnp.sign(diag_r) + 0.5)                            # 0 -> +1 (kornia)
    rot = q * col_sign[:, None, :]
    return jnp.concatenate([rot, temp[:, :, 3:4]], axis=-1)                # (B,3,4)


# ------------------------------- ProjectLoss ----------------------------------

class ProjectLossPallas:
    def __init__(self, M_proj):
        img_w = 800.0
        img_h = 800.0
        M1 = np.array([[img_w / 2, 0, 0, 0],
                       [0, img_h / 2, 0, 0],
                       [0, 0, 1, 0],
                       [img_w / 2, img_h / 2, 0, 1]], dtype=np.float64)
        M = (np.asarray(M_proj, np.float64) @ M1).astype(np.float32)
        self.M = jnp.asarray(M)                                            # (4,4)
        camera_matrix = M[:3, :3].T.copy()
        camera_matrix[0, 2] = 400
        camera_matrix[1, 2] = 400
        camera_matrix[2, 2] = 1
        # PyTorch stores intrinsics in float64; kept as float32 here (no f64 on TPU).
        self.intrinsics = jnp.asarray(camera_matrix[None, ...], dtype=jnp.float32)
        self.eps = 1e-5

    def _prepare(self, verts3d, points2d, affine):
        """Plain-JAX glue shared by the Pallas path and the jnp reference path."""
        B, N, _ = points2d.shape
        verts3d = verts3d.astype(jnp.float32)
        points2d = points2d.astype(jnp.float32)
        affine = affine.astype(jnp.float32)

        # points2d_inv = inv(K) applied to homogeneous points2d.  K's bottom row is
        # [0,0,1], so this is a 2x2 linear part + bias — no homogeneous ones needed.
        bottom = jnp.broadcast_to(
            jnp.array([[[0.0, 0.0, 1.0]]], dtype=jnp.float32), (B, 1, 3))
        K = jnp.concatenate([affine, bottom], axis=1)                      # (B,3,3)
        inv_k = jnp.linalg.inv(K)
        points2d_inv = (jnp.einsum('bij,bnj->bni', inv_k[:, :2, :2], points2d)
                        + inv_k[:, :2, 2][:, None, :])                     # (B,N,2)

        # PnP-DLT (glue: SVD/QR based)
        intrinsics = jnp.tile(self.intrinsics, (B, 1, 1))
        RT_ = solve_pnp_dlt(verts3d, points2d_inv, intrinsics,
                            svd_eps=self.eps)                              # (B,3,4)

        bottom4 = jnp.broadcast_to(
            jnp.array([[[0.0, 0.0, 0.0, 1.0]]], jnp.float32), (B, 1, 4))
        RT = jnp.concatenate([RT_, bottom4], axis=1)                       # (B,4,4)
        RT = jnp.transpose(RT, (0, 2, 1))
        RT = RT.at[:, :, :2].multiply(-1.0)

        # Hoisted out of the kernel: P = RT @ M (one tiny batched matmul in XLA).
        P = jnp.einsum('bij,jk->bik', RT, self.M)                          # (B,4,4)
        return P, points2d_inv

    def __call__(self, verts3d, points2d, affine):
        P, points2d_inv = self._prepare(verts3d, points2d, affine)
        # Pallas: reprojection + perspective divide + L1 mean (fused on-chip).
        return reproject_l1_loss(P, verts3d.astype(jnp.float32), points2d_inv)

    def reference(self, verts3d, points2d, affine):
        """Pure-jnp forward (same glue, jnp final step) for correctness checking."""
        P, points2d_inv = self._prepare(verts3d, points2d, affine)
        B, N, _ = points2d.shape
        ones = jnp.ones((B, N, 1), jnp.float32)
        verts_homo = jnp.concatenate([verts3d.astype(jnp.float32), ones], axis=-1)
        verts = jnp.einsum('bnj,bjk->bnk', verts_homo, P)
        reproj = verts[..., :2] / verts[..., 3:4]
        return jnp.mean(jnp.abs(reproj - points2d_inv))


# ----------------------------------- main --------------------------------------

if __name__ == "__main__":
    B, N = 2, 8
    f = 1.0
    # Row-vector perspective projection (w_clip = z); only used to build M / intrinsics.
    M_proj = np.array([[f, 0.0, 0.0, 0.0],
                       [0.0, f, 0.0, 0.0],
                       [0.0, 0.0, 1.0, 1.0],
                       [0.0, 0.0, -0.1, 0.0]], dtype=np.float64)
    model = ProjectLossPallas(M_proj)

    key = jax.random.PRNGKey(0)
    k_xy, k_z, k_noise = jax.random.split(key, 3)
    xy = jax.random.uniform(k_xy, (B, N, 2), minval=-1.0, maxval=1.0)
    z = jax.random.uniform(k_z, (B, N, 1), minval=3.0, maxval=6.0)
    verts3d = jnp.concatenate([xy, z], axis=-1).astype(jnp.float32)

    # points2d: pinhole projection of verts3d with the module intrinsics (+ small noise)
    fx = 400.0 * f
    u = fx * verts3d[..., 0] / verts3d[..., 2] + 400.0
    v = fx * verts3d[..., 1] / verts3d[..., 2] + 400.0
    noise = jax.random.uniform(k_noise, (B, N, 2), minval=-0.5, maxval=0.5)
    points2d = (jnp.stack([u, v], axis=-1) + noise).astype(jnp.float32)

    affine = jnp.broadcast_to(
        jnp.array([[1.0, 0.0, 2.0], [0.0, 1.0, -3.0]], dtype=jnp.float32), (B, 2, 3))

    loss = jax.block_until_ready(model(verts3d, points2d, affine))
    ref = jax.block_until_ready(model.reference(verts3d, points2d, affine))

    assert bool(jnp.isfinite(loss)), loss
    assert bool(jnp.allclose(loss, ref, rtol=2e-3, atol=2e-3)), (loss, ref)
    print("KERNEL_OK")
</pallas_src>

<mosaic_0001>
module attributes {stable_mosaic.version = 11 : i64} {
  func.func @_reproject_l1_kernel(%arg0: i32, %arg1: memref<2x16xf32, #tpu.memory_space<vmem>>, %arg2: memref<5x2x8xf32, #tpu.memory_space<vmem>>, %arg3: memref<1x2x8xf32, #tpu.memory_space<vmem>>) attributes {dimension_semantics = [#tpu.dimension_semantics<parallel>], iteration_bounds = array<i64: 1>, scalar_prefetch = 0 : i64, scratch_operands = 0 : i64, tpu.core_type = #tpu.core_type<tc>, window_params = [{pipeline_mode = #tpu.pipeline_mode<synchronous>, transform_indices = @transform_0, window_bounds = array<i64: 2, 16>}, {transform_indices = @transform_1, window_bounds = array<i64: 5, 2, 8>}, {transform_indices = @transform_2, window_bounds = array<i64: 1, 2, 8>}]} {
    %c0 = arith.constant 0 : index
    %c0_0 = arith.constant 0 : index
    %c0_1 = arith.constant 0 : index
    %0 = vector.load %arg2[%c0, %c0_0, %c0_1] : memref<5x2x8xf32, #tpu.memory_space<vmem>>, vector<1x2x8xf32>
    %1 = vector.shape_cast %0 : vector<1x2x8xf32> to vector<2x8xf32>
    %c1 = arith.constant 1 : index
    %c0_2 = arith.constant 0 : index
    %c0_3 = arith.constant 0 : index
    %2 = vector.load %arg2[%c1, %c0_2, %c0_3] : memref<5x2x8xf32, #tpu.memory_space<vmem>>, vector<1x2x8xf32>
    %3 = vector.shape_cast %2 : vector<1x2x8xf32> to vector<2x8xf32>
    %c2 = arith.constant 2 : index
    %c0_4 = arith.constant 0 : index
    %c0_5 = arith.constant 0 : index
    %4 = vector.load %arg2[%c2, %c0_4, %c0_5] : memref<5x2x8xf32, #tpu.memory_space<vmem>>, vector<1x2x8xf32>
    %5 = vector.shape_cast %4 : vector<1x2x8xf32> to vector<2x8xf32>
    %c3 = arith.constant 3 : index
    %c0_6 = arith.constant 0 : index
    %c0_7 = arith.constant 0 : index
    %6 = vector.load %arg2[%c3, %c0_6, %c0_7] : memref<5x2x8xf32, #tpu.memory_space<vmem>>, vector<1x2x8xf32>
    %7 = vector.shape_cast %6 : vector<1x2x8xf32> to vector<2x8xf32>
    %c4 = arith.constant 4 : index
    %c0_8 = arith.constant 0 : index
    %c0_9 = arith.constant 0 : index
    %8 = vector.load %arg2[%c4, %c0_8, %c0_9] : memref<5x2x8xf32, #tpu.memory_space<vmem>>, vector<1x2x8xf32>
    %9 = vector.shape_cast %8 : vector<1x2x8xf32> to vector<2x8xf32>
    %c0_10 = arith.constant 0 : index
    %c0_11 = arith.constant 0 : index
    %10 = vector.load %arg1[%c0_10, %c0_11] : memref<2x16xf32, #tpu.memory_space<vmem>>, vector<2x16xf32>
    %11 = vector.extract_strided_slice %10 {offsets = [0, 0], sizes = [2, 1], strides = [1, 1]} : vector<2x16xf32> to vector<2x1xf32>
    %12 = vector.broadcast %11 : vector<2x1xf32> to vector<2x8xf32>
    %13 = arith.mulf %1, %12 : vector<2x8xf32>
    %14 = vector.extract_strided_slice %10 {offsets = [0, 4], sizes = [2, 1], strides = [1, 1]} : vector<2x16xf32> to vector<2x1xf32>
    %15 = vector.broadcast %14 : vector<2x1xf32> to vector<2x8xf32>
    %16 = arith.mulf %3, %15 : vector<2x8xf32>
    %17 = arith.addf %13, %16 : vector<2x8xf32>
    %18 = vector.extract_strided_slice %10 {offsets = [0, 8], sizes = [2, 1], strides = [1, 1]} : vector<2x16xf32> to vector<2x1xf32>
    %19 = vector.broadcast %18 : vector<2x1xf32> to vector<2x8xf32>
    %20 = arith.mulf %5, %19 : vector<2x8xf32>
    %21 = arith.addf %17, %20 : vector<2x8xf32>
    %22 = vector.extract_strided_slice %10 {offsets = [0, 12], sizes = [2, 1], strides = [1, 1]} : vector<2x16xf32> to vector<2x1xf32>
    %23 = vector.broadcast %22 : vector<2x1xf32> to vector<2x8xf32>
    %24 = arith.addf %21, %23 : vector<2x8xf32>
    %25 = vector.extract_strided_slice %10 {offsets = [0, 1], sizes = [2, 1], strides = [1, 1]} : vector<2x16xf32> to vector<2x1xf32>
    %26 = vector.broadcast %25 : vector<2x1xf32> to vector<2x8xf32>
    %27 = arith.mulf %1, %26 : vector<2x8xf32>
    %28 = vector.extract_strided_slice %10 {offsets = [0, 5], sizes = [2, 1], strides = [1, 1]} : vector<2x16xf32> to vector<2x1xf32>
    %29 = vector.broadcast %28 : vector<2x1xf32> to vector<2x8xf32>
    %30 = arith.mulf %3, %29 : vector<2x8xf32>
    %31 = arith.addf %27, %30 : vector<2x8xf32>
    %32 = vector.extract_strided_slice %10 {offsets = [0, 9], sizes = [2, 1], strides = [1, 1]} : vector<2x16xf32> to vector<2x1xf32>
    %33 = vector.broadcast %32 : vector<2x1xf32> to vector<2x8xf32>
    %34 = arith.mulf %5, %33 : vector<2x8xf32>
    %35 = arith.addf %31, %34 : vector<2x8xf32>
    %36 = vector.extract_strided_slice %10 {offsets = [0, 13], sizes = [2, 1], strides = [1, 1]} : vector<2x16xf32> to vector<2x1xf32>
    %37 = vector.broadcast %36 : vector<2x1xf32> to vector<2x8xf32>
    %38 = arith.addf %35, %37 : vector<2x8xf32>
    %39 = vector.extract_strided_slice %10 {offsets = [0, 3], sizes = [2, 1], strides = [1, 1]} : vector<2x16xf32> to vector<2x1xf32>
    %40 = vector.broadcast %39 : vector<2x1xf32> to vector<2x8xf32>
    %41 = arith.mulf %1, %40 : vector<2x8xf32>
    %42 = vector.extract_strided_slice %10 {offsets = [0, 7], sizes = [2, 1], strides = [1, 1]} : vector<2x16xf32> to vector<2x1xf32>
    %43 = vector.broadcast %42 : vector<2x1xf32> to vector<2x8xf32>
    %44 = arith.mulf %3, %43 : vector<2x8xf32>
    %45 = arith.addf %41, %44 : vector<2x8xf32>
    %46 = vector.extract_strided_slice %10 {offsets = [0, 11], sizes = [2, 1], strides = [1, 1]} : vector<2x16xf32> to vector<2x1xf32>
    %47 = vector.broadcast %46 : vector<2x1xf32> to vector<2x8xf32>
    %48 = arith.mulf %5, %47 : vector<2x8xf32>
    %49 = arith.addf %45, %48 : vector<2x8xf32>
    %50 = vector.extract_strided_slice %10 {offsets = [0, 15], sizes = [2, 1], strides = [1, 1]} : vector<2x16xf32> to vector<2x1xf32>
    %51 = vector.broadcast %50 : vector<2x1xf32> to vector<2x8xf32>
    %52 = arith.addf %49, %51 : vector<2x8xf32>
    %53 = tpu.reciprocal %52 {approx = true} : vector<2x8xf32> -> vector<2x8xf32>
    %54 = arith.mulf %52, %53 : vector<2x8xf32>
    %cst = arith.constant 2.000000e+00 : f32
    %55 = vector.broadcast %cst : f32 to vector<2x8xf32>
    %56 = arith.subf %55, %54 : vector<2x8xf32>
    %57 = arith.mulf %53, %56 : vector<2x8xf32>
    %58 = arith.mulf %24, %57 : vector<2x8xf32>
    %59 = arith.subf %58, %7 : vector<2x8xf32>
    %60 = math.absf %59 : vector<2x8xf32>
    %61 = arith.mulf %38, %57 : vector<2x8xf32>
    %62 = arith.subf %61, %9 : vector<2x8xf32>
    %63 = math.absf %62 : vector<2x8xf32>
    %64 = arith.addf %60, %63 : vector<2x8xf32>
    %c0_12 = arith.constant 0 : index
    %c0_13 = arith.constant 0 : index
    %c0_14 = arith.constant 0 : index
    %65 = vector.load %arg3[%c0_12, %c0_13, %c0_14] : memref<1x2x8xf32, #tpu.memory_space<vmem>>, vector<1x2x8xf32>
    %66 = vector.shape_cast %65 : vector<1x2x8xf32> to vector<2x8xf32>
    %67 = vector.shape_cast %64 : vector<2x8xf32> to vector<1x2x8xf32>
    tpu.vector_store %arg3[%c0_12, %c0_13, %c0_14], %67 {strides = array<i32>} : memref<1x2x8xf32, #tpu.memory_space<vmem>>, vector<1x2x8xf32>,
    return
  }
  func.func @transform_0(%arg0: i32) -> (i32, i32) {
    %c0_i32 = arith.constant 0 : i32
    %c0_i32_0 = arith.constant 0 : i32
    %c0_i32_1 = arith.constant 0 : i32
    return %c0_i32, %c0_i32_0 : i32, i32
  }
  func.func @transform_1(%arg0: i32) -> (i32, i32, i32) {
    %c0_i32 = arith.constant 0 : i32
    %c0_i32_0 = arith.constant 0 : i32
    %c0_i32_1 = arith.constant 0 : i32
    return %c0_i32, %c0_i32_0, %arg0 : i32, i32, i32
  }
  func.func @transform_2(%arg0: i32) -> (i32, i32, i32) {
    %c0_i32 = arith.constant 0 : i32
    %c0_i32_0 = arith.constant 0 : i32
    %c0_i32_1 = arith.constant 0 : i32
    return %arg0, %c0_i32, %c0_i32_0 : i32, i32, i32
  }
}

</mosaic_0001>

<llo_original>
// kernel: tpu_custom_call.1
$region0: #{tpu_custom_call.1}
  #allocation0 [shape = 'u32[]', space=smem, size = 0x4, offset = 0x4, fixed_abs, tag = 'smem constant byte address 0x4 - core index']
  #allocation1 [shape = 'u32[144,128]{1,0:T(1,128)}', space=vmem, size = 0x12000, scoped, tag = 'internal scratch']
  %s0 = inlined_call_operand.hbm [shape: f32[2,16], index: 0, kind: input, shape index: {}]
  %s1 = inlined_call_operand.hbm [shape: f32[5,2,8], index: 1, kind: input, shape index: {}]
  %s2 = inlined_call_operand.hbm [shape: f32[1,2,8], index: 2, kind: output, shape index: {}]
  %s3 = sld [smem:[#allocation0]]
  $region26: #{tpu_custom_call.1} parent=0
    _
  %s5 = ssub.s32 1, %s3
  %s6 = scalar_select 0, %s5, %s3
  $region1: #{tpu_custom_call.1} parent=0
    #allocation2 [shape = 'u8[1024]{0}', space=vmem, size = 0x400, scoped, tag = 'input window, operand 0, single buffered']
    #allocation3 [shape = 's32[1]{0}', space=sflag, size = 0x4, scoped, tag = 'scoped memory for tpu_custom_call.1']
    #allocation4 [shape = 's32[1]{0}', space=sflag, size = 0x4, scoped, tag = 'scoped memory for tpu_custom_call.1']
    #allocation5 [shape = 'u8[5120]{0}', space=vmem, size = 0x1400, scoped, tag = 'input window, operand 1, single buffered']
    #allocation6 [shape = 's32[1]{0}', space=sflag, size = 0x4, scoped, tag = 'scoped memory for tpu_custom_call.1']
    #allocation7 [shape = 'u8[1024]{0}', space=vmem, size = 0x400, scoped, tag = 'output window, operand 0, single buffered']
    %7 = vsyncpa [#allocation3], 0
    %8 = vsyncpa [#allocation6], 0
    %9 = vsyncpa [#allocation4], 0
    // Predicated region
    $region2: #{tpu_custom_call.1} parent=1 // pred_check
      _
    $region3: #{tpu_custom_call.1} parent=1 // pred_check_branch
      %11 = sbr.rel (0) target = $region5
    $region4: #{tpu_custom_call.1} parent=1 // pred_region
      %s13 = ssub.s32 32, 32
      %14 = vsyncadd [#allocation3], %s13
      %s16 = sshll.u32 [#allocation2], 4
      %s17 = int_to_ptr.vmem [resolvable:$true] %s16
      %19 = dma.hbm_to_vmem [thread:$0]  %s0, 32, %s17, [#allocation3]
    $region5: #{tpu_custom_call.1} parent=1 // pred_fallthru
      _
    // Predicated region
    $region6: #{tpu_custom_call.1} parent=1 // pred_check
      _
    $region7: #{tpu_custom_call.1} parent=1 // pred_check_branch
      %21 = sbr.rel (0) target = $region9
    $region8: #{tpu_custom_call.1} parent=1 // pred_region
      %s23 = ssub.s32 160, 160
      %24 = vsyncadd [#allocation6], %s23
      %s25 = sshll.u32 [#allocation5], 4
      %s26 = int_to_ptr.vmem [resolvable:$true] %s25
      %31 = dma.hbm_to_vmem [thread:$0]  %s1, 160, %s26, [#allocation6], 32, 32, 2
    $region9: #{tpu_custom_call.1} parent=1 // pred_fallthru
      _
    // Predicated region
    $region10: #{tpu_custom_call.1} parent=1 // pred_check
      _
    $region11: #{tpu_custom_call.1} parent=1 // pred_check_branch
      %33 = sbr.rel (0) target = $region13
    $region12: #{tpu_custom_call.1} parent=1 // pred_region
      %34 = dma.done [#allocation3], 32
    $region13: #{tpu_custom_call.1} parent=1 // pred_fallthru
      _
    // Predicated region
    $region14: #{tpu_custom_call.1} parent=1 // pred_check
      _
    $region15: #{tpu_custom_call.1} parent=1 // pred_check_branch
      %36 = sbr.rel (0) target = $region17
    $region16: #{tpu_custom_call.1} parent=1 // pred_region
      %37 = dma.done [#allocation6], 160
    $region17: #{tpu_custom_call.1} parent=1 // pred_fallthru
      _
    %v38 = vld [vmem:[#allocation5] sm:$0x3]
    %s39 = scalar_lea.vmem [#allocation5], 2
    %v40 = vld [vmem:[%s39] sm:$0x3]
    %s41 = scalar_lea.vmem [#allocation5], 4
    %v42 = vld [vmem:[%s41] sm:$0x3]
    %s43 = scalar_lea.vmem [#allocation5], 6
    %v44 = vld [vmem:[%s43] sm:$0x3]
    %s45 = scalar_lea.vmem [#allocation5], 8
    %v46 = vld [vmem:[%s45] sm:$0x3]
    %v47 = vld [vmem:[#allocation2] sm:$0x3]
    %49 = vset.pattern.permute.xlu0 0
    %50 = vperm.xlu0 %49, %v47
    %v51 = vpop.permute.xlu0 %50
    %v53 = vmul.f32 %v38, %v51
    %54 = vset.pattern.permute.xlu0 4
    %55 = vperm.xlu0 %54, %v47
    %v56 = vpop.permute.xlu0 %55
    %v58 = vmul.f32 %v40, %v56
    %v59 = vadd.f32 %v53, %v58
    %60 = vset.pattern.permute.xlu0 8
    %61 = vperm.xlu0 %60, %v47
    %v62 = vpop.permute.xlu0 %61
    %v64 = vmul.f32 %v42, %v62
    %v65 = vadd.f32 %v59, %v64
    %66 = vset.pattern.permute.xlu0 12
    %67 = vperm.xlu0 %66, %v47
    %v68 = vpop.permute.xlu0 %67
    %v70 = vadd.f32 %v65, %v68
    %71 = vset.pattern.permute.xlu0 1
    %72 = vperm.xlu0 %71, %v47
    %v73 = vpop.permute.xlu0 %72
    %v75 = vmul.f32 %v38, %v73
    %76 = vset.pattern.permute.xlu0 5
    %77 = vperm.xlu0 %76, %v47
    %v78 = vpop.permute.xlu0 %77
    %v80 = vmul.f32 %v40, %v78
    %v81 = vadd.f32 %v75, %v80
    %82 = vset.pattern.permute.xlu0 9
    %83 = vperm.xlu0 %82, %v47
    %v84 = vpop.permute.xlu0 %83
    %v86 = vmul.f32 %v42, %v84
    %v87 = vadd.f32 %v81, %v86
    %88 = vset.pattern.permute.xlu0 13
    %89 = vperm.xlu0 %88, %v47
    %v90 = vpop.permute.xlu0 %89
    %v92 = vadd.f32 %v87, %v90
    %93 = vset.pattern.permute.xlu0 3
    %94 = vperm.xlu0 %93, %v47
    %v95 = vpop.permute.xlu0 %94
    %v97 = vmul.f32 %v38, %v95
    %98 = vset.pattern.permute.xlu0 7
    %99 = vperm.xlu0 %98, %v47
    %v100 = vpop.permute.xlu0 %99
    %v102 = vmul.f32 %v40, %v100
    %v103 = vadd.f32 %v97, %v102
    %104 = vset.pattern.permute.xlu0 11
    %105 = vperm.xlu0 %104, %v47
    %v106 = vpop.permute.xlu0 %105
    %v108 = vmul.f32 %v42, %v106
    %v109 = vadd.f32 %v103, %v108
    %110 = vset.pattern.permute.xlu0 15
    %111 = vperm.xlu0 %110, %v47
    %v112 = vpop.permute.xlu0 %111
    %v114 = vadd.f32 %v109, %v112
    %v115 = vrcp.pop %v114
    %v116 = vmul.f32 %v114, %v115
    %v117 = vsub.f32 2.0, %v116
    %v118 = vmul.f32 %v115, %v117
    %v119 = vmul.f32 %v70, %v118
    %v120 = vsub.f32 %v119, %v44
    %v121 = vand.u32 2147483647, %v120
    %v122 = vmul.f32 %v92, %v118
    %v123 = vsub.f32 %v122, %v46
    %v124 = vand.u32 2147483647, %v123
    %v125 = vadd.f32 %v121, %v124
    %vm126 = vcmask 58368
    %127 = vst.msk [vmem:[#allocation7] sm:$0x3] %vm126, %v125
    // Predicated region
    $region18: #{tpu_custom_call.1} parent=1 // pred_check
      _
    $region19: #{tpu_custom_call.1} parent=1 // pred_check_branch
      %129 = sbr.rel (0) target = $region21
    $region20: #{tpu_custom_call.1} parent=1 // pred_region
      %s131 = ssub.s32 32, 32
      %132 = vsyncadd [#allocation4], %s131
      %s134 = sshll.u32 [#allocation7], 4
      %s135 = int_to_ptr.vmem [resolvable:$true] %s134
      %137 = dma.vmem_to_hbm [thread:$0]  %s135, 32, %s2, [#allocation4]
    $region21: #{tpu_custom_call.1} parent=1 // pred_fallthru
      _
    // Predicated region
    $region22: #{tpu_custom_call.1} parent=1 // pred_check
      _
    $region23: #{tpu_custom_call.1} parent=1 // pred_check_branch
      %139 = sbr.rel (0) target = $region25
    $region24: #{tpu_custom_call.1} parent=1 // pred_region
      %140 = dma.done [#allocation4], 32
    $region25: #{tpu_custom_call.1} parent=1 // pred_fallthru
      _
    %141 = vsyncpa [#allocation3], 1
    %142 = vsyncpa [#allocation6], 1
    %143 = vsyncpa [#allocation4], 1

</llo_original>
